<compile_context>
chip_gen: v7x
topology: tpu7x:2x2x1
jax: 0.10.0
libtpu: 0.0.40
codegen_flags: <defaults>
</compile_context>

<pallas_src>
import jax
import jax.numpy as jnp
from jax.experimental import pallas as pl
from jax.experimental.pallas import tpu as pltpu


def bert_pooler_kernel(x_ref, w_ref, b_ref, o_ref):
    # Dense on the [CLS] rows: x @ W with f32 accumulation on the MXU.
    acc = jnp.dot(x_ref[...], w_ref[...], preferred_element_type=jnp.float32)
    acc = acc + b_ref[...]                      # bias pre-cast to f32, (1, H) broadcast
    o_ref[...] = jnp.tanh(acc).astype(o_ref.dtype)   # tanh -> EUP slot


def bert_pooler(hidden_states, w, b, *, tm=256, use_bf16_matmul=False,
                vmem_limit_bytes=None):
    """hidden_states: [B, S, H]; w: [H, H] ([in, out] layout); b: [H]."""
    B, S, H = hidden_states.shape
    assert w.shape == (H, H) and b.shape == (H,)

    out_dtype = hidden_states.dtype

    # CLS-token slice is layout plumbing (one row per sequence), done wrapper-side.
    first = hidden_states[:, 0, :]                       # [B, H]

    # Hoisted one-time cast of the bias (avoid per-grid-step casts in the kernel).
    b2 = b.reshape(1, H).astype(jnp.float32)

    if use_bf16_matmul:
        # v6e/v7x: bf16 MXU inputs, f32 accumulation (set inside kernel).
        first = first.astype(jnp.bfloat16)
        w = w.astype(jnp.bfloat16)

    # Row-tile selection: clamp to batch, keep sublane alignment when actually tiling,
    # and pad the batch up to a multiple of tm (masked-tail alternative to assert).
    sublane = 16 if use_bf16_matmul else 8
    tm = int(min(max(tm, 1), B))
    if tm < B:
        tm = max(sublane, (tm // sublane) * sublane)
    grid_m = pl.cdiv(B, tm)
    m_pad = grid_m * tm
    if m_pad != B:
        first = jnp.pad(first, ((0, m_pad - B), (0, 0)))

    # Explicit scoped-VMEM budget: single-buffered weight/bias + double-buffered
    # x/out row tiles, with 2x headroom; capped for v7x (64 MiB physical).
    if vmem_limit_bytes is None:
        need = (w.size * jnp.dtype(w.dtype).itemsize
                + b2.size * 4
                + 2 * tm * H * jnp.dtype(first.dtype).itemsize
                + 2 * tm * H * jnp.dtype(out_dtype).itemsize)
        vmem_limit_bytes = int(min(max(2 * need, 32 << 20), 56 << 20))

    out = pl.pallas_call(
        bert_pooler_kernel,
        out_shape=jax.ShapeDtypeStruct((m_pad, H), out_dtype),
        grid_spec=pltpu.PrefetchScalarGridSpec(
            num_scalar_prefetch=0,
            grid=(grid_m,),
            in_specs=[
                # CLS rows: tiled over the grid.
                pl.BlockSpec((tm, H), lambda i: (i, 0)),
                # Weight/bias: constant block, VMEM-resident, single-buffered.
                pl.BlockSpec((H, H), lambda i: (0, 0), pipeline_mode=pl.Buffered(1)),
                pl.BlockSpec((1, H), lambda i: (0, 0), pipeline_mode=pl.Buffered(1)),
            ],
            out_specs=pl.BlockSpec((tm, H), lambda i: (i, 0)),
        ),
        compiler_params=pltpu.CompilerParams(
            dimension_semantics=("parallel",),
            vmem_limit_bytes=vmem_limit_bytes,
        ),
    )(first, w, b2)

    return out[:B] if m_pad != B else out


def reference(hidden_states, w, b):
    first = hidden_states[:, 0, :].astype(jnp.float32)
    return jnp.tanh(first @ w.astype(jnp.float32) + b.astype(jnp.float32))


if __name__ == "__main__":
    # Small config: batch=2, seq=8, hidden=32.
    batch, seq, hidden_size = 2, 8, 32

    key = jax.random.PRNGKey(0)
    k_hs, k_w, k_b = jax.random.split(key, 3)

    hidden_states = jax.random.normal(k_hs, (batch, seq, hidden_size), dtype=jnp.float32)
    # Synthetic deterministic params. Weight stored as [in, out] so kernel does x @ w
    # (equivalent to nn.Linear with weight = w.T).
    w = jax.random.normal(k_w, (hidden_size, hidden_size), dtype=jnp.float32) * 0.02
    b = jax.random.normal(k_b, (hidden_size,), dtype=jnp.float32) * 0.02

    out = bert_pooler(hidden_states, w, b)
    jax.block_until_ready(out)

    ref = reference(hidden_states, w, b)
    assert out.shape == (batch, hidden_size)
    assert jnp.allclose(out, ref, atol=1e-5, rtol=1e-5), "mismatch vs reference"

    print("KERNEL_OK")
</pallas_src>

<mosaic_0001>
module attributes {stable_mosaic.version = 11 : i64} {
  func.func @bert_pooler_kernel(%arg0: i32, %arg1: memref<2x32xf32, #tpu.memory_space<vmem>>, %arg2: memref<32x32xf32, #tpu.memory_space<vmem>>, %arg3: memref<1x32xf32, #tpu.memory_space<vmem>>, %arg4: memref<2x32xf32, #tpu.memory_space<vmem>>) attributes {dimension_semantics = [#tpu.dimension_semantics<parallel>], iteration_bounds = array<i64: 1>, scalar_prefetch = 0 : i64, scratch_operands = 0 : i64, tpu.core_type = #tpu.core_type<tc>, window_params = [{transform_indices = @transform_0, window_bounds = array<i64: 2, 32>}, {pipeline_mode = #tpu.pipeline_mode<synchronous>, transform_indices = @transform_1, window_bounds = array<i64: 32, 32>}, {pipeline_mode = #tpu.pipeline_mode<synchronous>, transform_indices = @transform_2, window_bounds = array<i64: 1, 32>}, {transform_indices = @transform_3, window_bounds = array<i64: 2, 32>}]} {
    %c0 = arith.constant 0 : index
    %c0_0 = arith.constant 0 : index
    %0 = vector.load %arg1[%c0, %c0_0] : memref<2x32xf32, #tpu.memory_space<vmem>>, vector<2x32xf32>
    %c0_1 = arith.constant 0 : index
    %c0_2 = arith.constant 0 : index
    %1 = vector.load %arg2[%c0_1, %c0_2] : memref<32x32xf32, #tpu.memory_space<vmem>>, vector<32x32xf32>
    %cst = arith.constant dense<0.000000e+00> : vector<2x32xf32>
    %2 = tpu.matmul %0, %1, %cst {dimension_numbers = #tpu.dot_dimension_numbers<[1], [0], [0], [1], [0, 0, 1, 1], [], []>} : vector<2x32xf32>, vector<32x32xf32>, vector<2x32xf32> -> vector<2x32xf32>
    %c0_3 = arith.constant 0 : index
    %c0_4 = arith.constant 0 : index
    %3 = vector.load %arg3[%c0_3, %c0_4] : memref<1x32xf32, #tpu.memory_space<vmem>>, vector<1x32xf32>
    %4 = vector.broadcast %3 : vector<1x32xf32> to vector<2x32xf32>
    %5 = arith.addf %2, %4 : vector<2x32xf32>
    %6 = math.tanh %5 : vector<2x32xf32>
    %c0_5 = arith.constant 0 : index
    %c0_6 = arith.constant 0 : index
    %7 = vector.load %arg4[%c0_5, %c0_6] : memref<2x32xf32, #tpu.memory_space<vmem>>, vector<2x32xf32>
    tpu.vector_store %arg4[%c0_5, %c0_6], %6 {strides = array<i32>} : memref<2x32xf32, #tpu.memory_space<vmem>>, vector<2x32xf32>,
    return
  }
  func.func @transform_0(%arg0: i32) -> (i32, i32) {
    %c0_i32 = arith.constant 0 : i32
    %c0_i32_0 = arith.constant 0 : i32
    return %arg0, %c0_i32 : i32, i32
  }
  func.func @transform_1(%arg0: i32) -> (i32, i32) {
    %c0_i32 = arith.constant 0 : i32
    %c0_i32_0 = arith.constant 0 : i32
    %c0_i32_1 = arith.constant 0 : i32
    return %c0_i32, %c0_i32_0 : i32, i32
  }
  func.func @transform_2(%arg0: i32) -> (i32, i32) {
    %c0_i32 = arith.constant 0 : i32
    %c0_i32_0 = arith.constant 0 : i32
    %c0_i32_1 = arith.constant 0 : i32
    return %c0_i32, %c0_i32_0 : i32, i32
  }
  func.func @transform_3(%arg0: i32) -> (i32, i32) {
    %c0_i32 = arith.constant 0 : i32
    %c0_i32_0 = arith.constant 0 : i32
    return %arg0, %c0_i32 : i32, i32
  }
}

</mosaic_0001>

<llo_original>
// kernel: tpu_custom_call.1
$region0: #{tpu_custom_call.1}
  #allocation0 [shape = 'u32[]', space=smem, size = 0x4, offset = 0x4, fixed_abs, tag = 'smem constant byte address 0x4 - core index']
  #allocation1 [shape = 'u32[144,128]{1,0:T(1,128)}', space=vmem, size = 0x12000, scoped, tag = 'internal scratch']
  %s0 = inlined_call_operand.hbm [shape: f32[2,32], index: 0, kind: input, shape index: {}]
  %s1 = inlined_call_operand.hbm [shape: f32[32,32], index: 1, kind: input, shape index: {}]
  %s2 = inlined_call_operand.vmem [shape: f32[1,32], index: 2, kind: input, shape index: {}]
  %s3 = inlined_call_operand.hbm [shape: f32[2,32], index: 3, kind: output, shape index: {}]
  %s4 = sld [smem:[#allocation0]]
  $region30: #{tpu_custom_call.1} parent=0
    _
  %s6 = ssub.s32 1, %s4
  %s7 = scalar_select 0, %s6, %s4
  $region1: #{tpu_custom_call.1} parent=0
    #allocation2 [shape = 'u8[1024]{0}', space=vmem, size = 0x400, scoped, tag = 'input window, operand 0, single buffered']
    #allocation3 [shape = 's32[1]{0}', space=sflag, size = 0x4, scoped, tag = 'scoped memory for tpu_custom_call.1']
    #allocation4 [shape = 's32[1]{0}', space=sflag, size = 0x4, scoped, tag = 'scoped memory for tpu_custom_call.1']
    #allocation5 [shape = 'u8[16384]{0}', space=vmem, size = 0x4000, scoped, tag = 'input window, operand 1, single buffered']
    #allocation6 [shape = 's32[1]{0}', space=sflag, size = 0x4, scoped, tag = 'scoped memory for tpu_custom_call.1']
    #allocation7 [shape = 'u8[1024]{0}', space=vmem, size = 0x400, scoped, tag = 'output window, operand 0, single buffered']
    %8 = vsyncpa [#allocation3], 0
    %9 = vsyncpa [#allocation6], 0
    %10 = vsyncpa [#allocation4], 0
    // Predicated region
    $region2: #{tpu_custom_call.1} parent=1 // pred_check
      _
    $region3: #{tpu_custom_call.1} parent=1 // pred_check_branch
      %12 = sbr.rel (0) target = $region5
    $region4: #{tpu_custom_call.1} parent=1 // pred_region
      %s14 = ssub.s32 32, 32
      %15 = vsyncadd [#allocation3], %s14
      %s17 = sshll.u32 [#allocation2], 4
      %s18 = int_to_ptr.vmem [resolvable:$true] %s17
      %20 = dma.hbm_to_vmem [thread:$0]  %s0, 32, %s18, [#allocation3]
    $region5: #{tpu_custom_call.1} parent=1 // pred_fallthru
      _
    // Predicated region
    $region6: #{tpu_custom_call.1} parent=1 // pred_check
      _
    $region7: #{tpu_custom_call.1} parent=1 // pred_check_branch
      %22 = sbr.rel (0) target = $region9
    $region8: #{tpu_custom_call.1} parent=1 // pred_region
      %s24 = ssub.s32 512, 512
      %25 = vsyncadd [#allocation6], %s24
      %s26 = sshll.u32 [#allocation5], 4
      %s27 = int_to_ptr.vmem [resolvable:$true] %s26
      %32 = dma.hbm_to_vmem [thread:$0]  %s1, 512, %s27, [#allocation6], 128, 128, 8
    $region9: #{tpu_custom_call.1} parent=1 // pred_fallthru
      _
    // Predicated region
    $region10: #{tpu_custom_call.1} parent=1 // pred_check
      _
    $region11: #{tpu_custom_call.1} parent=1 // pred_check_branch
      %34 = sbr.rel (0) target = $region13
    $region12: #{tpu_custom_call.1} parent=1 // pred_region
      _
    $region13: #{tpu_custom_call.1} parent=1 // pred_fallthru
      _
    // Predicated region
    $region14: #{tpu_custom_call.1} parent=1 // pred_check
      _
    $region15: #{tpu_custom_call.1} parent=1 // pred_check_branch
      %36 = sbr.rel (0) target = $region17
    $region16: #{tpu_custom_call.1} parent=1 // pred_region
      %37 = dma.done [#allocation3], 32
    $region17: #{tpu_custom_call.1} parent=1 // pred_fallthru
      _
    // Predicated region
    $region18: #{tpu_custom_call.1} parent=1 // pred_check
      _
    $region19: #{tpu_custom_call.1} parent=1 // pred_check_branch
      %39 = sbr.rel (0) target = $region21
    $region20: #{tpu_custom_call.1} parent=1 // pred_region
      %40 = dma.done [#allocation6], 512
    $region21: #{tpu_custom_call.1} parent=1 // pred_fallthru
      _
    %v41 = vld [vmem:[#allocation2] sm:$0x3]
    %v42 = vld [vmem:[#allocation5] sm:$0xff]
    %v43 = vld [vmem:[#allocation5 + $0x8] sm:$0xff]
    %v44 = vld [vmem:[#allocation5 + $0x10] sm:$0xff]
    %v45 = vld [vmem:[#allocation5 + $0x18] sm:$0xff]
    %v46 = vld [vmem:[%s2] sm:$0x1]
    %v48 = vlaneseq
    %v49 = vshrl.u32 %v48, 7
    %v50 = vsub.s32 0, %v49
    %v51 = vrot.slane %v46, %v50
    %vm53 = vcmask 261120
    %v55 = vsel %vm53, %v41, 0
    %57 = vmatprep.subr.mxu0 0.0
    %58 = vmatpush1.msra.mxu0 %v42
    %59 = vmatprep.subr.mxu0 0.0
    %60 = vmatpush1.msra.mxu0 %v43
    %61 = vmatprep.subr.mxu0 0.0
    %62 = vmatpush1.msra.mxu0 %v44
    %63 = vmatprep.subr.mxu0 0.0
    %64 = vmatpush1.msra.mxu0 %v45
    %65 = vmatprep.subr.mxu0 0.0
    %66 = vmatpush1.msra.mxu0 0.0
    %67 = vmatprep.subr.mxu0 0.0
    %68 = vmatpush1.msra.mxu0 0.0
    %69 = vmatprep.subr.mxu0 0.0
    %70 = vmatpush1.msra.mxu0 0.0
    %71 = vmatprep.subr.mxu0 0.0
    %72 = vmatpush1.msra.mxu0 0.0
    %73 = vmatprep.subr.mxu0 0.0
    %74 = vmatpush1.msra.mxu0 0.0
    %75 = vmatprep.subr.mxu0 0.0
    %76 = vmatpush1.msra.mxu0 0.0
    %77 = vmatprep.subr.mxu0 0.0
    %78 = vmatpush1.msra.mxu0 0.0
    %79 = vmatprep.subr.mxu0 0.0
    %80 = vmatpush1.msra.mxu0 0.0
    %81 = vmatprep.subr.mxu0 0.0
    %82 = vmatpush1.msra.mxu0 0.0
    %83 = vmatprep.subr.mxu0 0.0
    %84 = vmatpush1.msra.mxu0 0.0
    %85 = vmatprep.subr.mxu0 0.0
    %86 = vmatpush1.msra.mxu0 0.0
    %87 = vmatprep.subr.mxu0 0.0
    %88 = vmatpush1.msra.mxu0 0.0
    %89 = vmatprep.subr.mxu0 0.0
    %90 = vmatpush1.msra.mxu0 0.0
    %91 = vmatprep.subr.mxu0 0.0
    %92 = vmatpush1.msra.mxu0 0.0
    %93 = vmatprep.subr.mxu0 0.0
    %94 = vmatpush1.msra.mxu0 0.0
    %95 = vmatprep.subr.mxu0 0.0
    %96 = vmatpush1.msra.mxu0 0.0
    %97 = vmatprep.subr.mxu0 0.0
    %98 = vmatpush1.msra.mxu0 0.0
    %99 = vmatprep.subr.mxu0 0.0
    %100 = vmatpush1.msra.mxu0 0.0
    %101 = vmatprep.subr.mxu0 0.0
    %102 = vmatpush1.msra.mxu0 0.0
    %103 = vmatprep.subr.mxu0 0.0
    %104 = vmatpush1.msra.mxu0 0.0
    %105 = vmatprep.subr.mxu0 0.0
    %106 = vmatpush1.msra.mxu0 0.0
    %107 = vmatprep.subr.mxu0 0.0
    %108 = vmatpush1.msra.mxu0 0.0
    %109 = vmatprep.subr.mxu0 0.0
    %110 = vmatpush1.msra.mxu0 0.0
    %111 = vmatprep.subr.mxu0 0.0
    %112 = vmatpush1.msra.mxu0 0.0
    %113 = vmatprep.subr.mxu0 0.0
    %114 = vmatpush1.msra.mxu0 0.0
    %115 = vmatprep.subr.mxu0 0.0
    %116 = vmatpush1.msra.mxu0 0.0
    %117 = vmatprep.subr.mxu0 0.0
    %118 = vmatpush1.msra.mxu0 0.0
    %119 = vmatprep.subr.mxu0 0.0
    %120 = vmatpush1.msra.mxu0 0.0
    %121 = vmatprep.mubr.f32.mxu0 0.0
    %122 = vmatmul.mubr.f32.gmra.mrb[0].mxu0 %v55
    %v123 = vpop.f32.mrb[0].mxu0
    %v124 = vadd.f32 %v51, %v123
    %v125 = vpop.f32.mrb[0].mxu0
    %126 = vdwg.mxu0
    %v127 = vtanh.pop %v124
    %vm128 = vcmask 254976
    %129 = vst.msk [vmem:[#allocation7] sm:$0x3] %vm128, %v127
    // Predicated region
    $region22: #{tpu_custom_call.1} parent=1 // pred_check
      _
    $region23: #{tpu_custom_call.1} parent=1 // pred_check_branch
      %131 = sbr.rel (0) target = $region25
    $region24: #{tpu_custom_call.1} parent=1 // pred_region
      %s133 = ssub.s32 32, 32
      %134 = vsyncadd [#allocation4], %s133
      %s136 = sshll.u32 [#allocation7], 4
      %s137 = int_to_ptr.vmem [resolvable:$true] %s136
      %139 = dma.vmem_to_hbm [thread:$0]  %s137, 32, %s3, [#allocation4]
    $region25: #{tpu_custom_call.1} parent=1 // pred_fallthru
      _
    // Predicated region
    $region26: #{tpu_custom_call.1} parent=1 // pred_check
      _
    $region27: #{tpu_custom_call.1} parent=1 // pred_check_branch
      %141 = sbr.rel (0) target = $region29
    $region28: #{tpu_custom_call.1} parent=1 // pred_region
      %142 = dma.done [#allocation4], 32
    $region29: #{tpu_custom_call.1} parent=1 // pred_fallthru
      _
    %143 = vsyncpa [#allocation3], 1
    %144 = vsyncpa [#allocation6], 1
    %145 = vsyncpa [#allocation4], 1

</llo_original>
